<compile_context>
chip_gen: v7x
topology: tpu7x:2x2x1
jax: 0.10.0
libtpu: 0.0.40
codegen_flags: <defaults>
</compile_context>

<pallas_src>
import jax
import jax.numpy as jnp
from jax.experimental import pallas as pl
from jax.experimental.pallas import tpu as pltpu


def _round_up(n, m):
    return ((n + m - 1) // m) * m


def actor_kernel(x_ref, w1_ref, b1_ref, w2_ref, b2_ref, w3_ref, b3_ref, o_ref):
    out_size = o_ref.shape[-1]
    # fc1 + relu  (cast x to bf16 in-kernel; f32 accumulate; elementwise in f32)
    xb = x_ref[...].astype(jnp.bfloat16)
    h1 = jnp.dot(xb, w1_ref[...], preferred_element_type=jnp.float32)
    h1 = jnp.maximum(h1 + b1_ref[...], 0.0)
    # fc2 + relu
    h2 = jnp.dot(h1.astype(jnp.bfloat16), w2_ref[...],
                 preferred_element_type=jnp.float32)
    h2 = jnp.maximum(h2 + b2_ref[...], 0.0)
    # fc3: weights padded to 128 output lanes (zero cols) and bias padded with -1e30
    # (finite!) so exp() underflows to exactly 0 on padded lanes. Do NOT change the pad
    # to -inf or nonzero weight columns, or max/exp can produce NaN.
    logits = jnp.dot(h2.astype(jnp.bfloat16), w3_ref[...],
                     preferred_element_type=jnp.float32)
    logits = logits + b3_ref[...]
    # numerically stable softmax over the full 128-lane vreg
    m = jnp.max(logits, axis=-1, keepdims=True)
    e = jnp.exp(logits - m)
    denom = jnp.sum(e, axis=-1, keepdims=True)
    probs = e * pl.reciprocal(denom, approx=False)  # exact: rows sum to 1 at f32 precision
    # Store only the real output columns (masked vst; store slot has huge slack here).
    o_ref[...] = probs[:, :out_size].astype(o_ref.dtype)


def prepare_actor_params(params):
    """One-time weight prep: bf16 MXU weights + fc3 lane padding. Biases stay f32."""
    w1, b1, w2, b2, w3, b3 = (params[k] for k in ("w1", "b1", "w2", "b2", "w3", "b3"))
    out_size = w3.shape[1]
    out_pad = _round_up(out_size, 128)
    # Zero weight columns + large-*finite*-negative bias columns -> exp underflows to 0.
    w3p = jnp.pad(w3, ((0, 0), (0, out_pad - out_size)))
    b3p = jnp.pad(b3, ((0, 0), (0, out_pad - out_size)), constant_values=-1e30)
    return {
        "w1": w1.astype(jnp.bfloat16),
        "b1": b1.astype(jnp.float32),
        "w2": w2.astype(jnp.bfloat16),
        "b2": b2.astype(jnp.float32),
        "w3": w3p.astype(jnp.bfloat16),
        "b3": b3p.astype(jnp.float32),
    }


def actor_forward(x, prepped, out_size, *, tb=2048):
    """x: (B, input_size) float32. prepped: output of prepare_actor_params.
    out_size: static number of actions. tb: batch tile size (rows, multiple of 8).
    """
    w1, b1, w2, b2, w3, b3 = (prepped[k] for k in ("w1", "b1", "w2", "b2", "w3", "b3"))
    B, in_size = x.shape
    hidden = w1.shape[1]
    out_pad = w3.shape[1]

    # Batch tiling: pad B to the f32 sublane granularity (8) and pick a large tile.
    # If a single tile would cover a reasonably large batch, split into two grid steps
    # so dimension_semantics=("parallel",) can shard across both v7x TensorCores.
    tb = _round_up(max(tb, 8), 8)
    B_pad = _round_up(max(B, 8), 8)
    TB = min(tb, B_pad)
    if TB == B_pad and B_pad >= 512:
        TB = _round_up((B_pad + 1) // 2, 8)
    B_pad = _round_up(B_pad, TB)  # even grid (no partial final block)
    if B_pad != B:
        x = jnp.pad(x, ((0, B_pad - B), (0, 0)))
    grid = (B_pad // TB,)

    cost = pl.CostEstimate(
        flops=2 * B_pad * (in_size * hidden + hidden * hidden + hidden * out_pad),
        transcendentals=B_pad * (out_pad + 1),
        bytes_accessed=(B_pad * in_size * 4 + B_pad * out_size * 4
                        + (in_size * hidden + hidden * hidden + hidden * out_pad) * 2
                        + (2 * hidden + out_pad) * 4),
    )

    out = pl.pallas_call(
        actor_kernel,
        out_shape=jax.ShapeDtypeStruct((B_pad, out_size), jnp.float32),
        grid=grid,
        in_specs=[
            pl.BlockSpec((TB, in_size), lambda i: (i, 0)),        # x tile (f32, pipelined)
            pl.BlockSpec((in_size, hidden), lambda i: (0, 0)),    # w1 bf16 (resident)
            pl.BlockSpec((1, hidden), lambda i: (0, 0)),          # b1 f32 (resident)
            pl.BlockSpec((hidden, hidden), lambda i: (0, 0)),     # w2 bf16 (resident)
            pl.BlockSpec((1, hidden), lambda i: (0, 0)),          # b2 f32 (resident)
            pl.BlockSpec((hidden, out_pad), lambda i: (0, 0)),    # w3 padded bf16 (resident)
            pl.BlockSpec((1, out_pad), lambda i: (0, 0)),         # b3 padded f32 (resident)
        ],
        out_specs=pl.BlockSpec((TB, out_size), lambda i: (i, 0)),  # unpadded output tile
        compiler_params=pltpu.CompilerParams(
            dimension_semantics=("parallel",),
            # NOTE: default scoped VMEM is plenty at these tile sizes; if tb is pushed
            # past ~8K rows on v5e, cap TB or set vmem_limit_bytes here.
        ),
        cost_estimate=cost,
    )(x, w1, b1, w2, b2, w3, b3)
    return out if B_pad == B else out[:B]


def init_actor_params(key, input_size, output_size, hidden=128):
    """Deterministic init mimicking nn.Linear's uniform(-1/sqrt(fan_in), 1/sqrt(fan_in))."""
    keys = jax.random.split(key, 6)

    def linear(kw, kb, fan_in, fan_out):
        bound = 1.0 / jnp.sqrt(jnp.float32(fan_in))
        # stored as (in, out) -> transpose of PyTorch's (out, in)
        w = jax.random.uniform(kw, (fan_in, fan_out), jnp.float32, -bound, bound)
        b = jax.random.uniform(kb, (1, fan_out), jnp.float32, -bound, bound)
        return w, b

    w1, b1 = linear(keys[0], keys[1], input_size, hidden)
    w2, b2 = linear(keys[2], keys[3], hidden, hidden)
    w3, b3 = linear(keys[4], keys[5], hidden, output_size)
    return {"w1": w1, "b1": b1, "w2": w2, "b2": b2, "w3": w3, "b3": b3}


def actor_reference(x, p):
    """Pure-f32 reference forward (matches the PyTorch module)."""
    h1 = jax.nn.relu(x @ p["w1"] + p["b1"])
    h2 = jax.nn.relu(h1 @ p["w2"] + p["b2"])
    return jax.nn.softmax(h2 @ p["w3"] + p["b3"], axis=-1)


if __name__ == "__main__":
    key = jax.random.PRNGKey(0)
    kx, kp, kx2 = jax.random.split(key, 3)

    batch, input_size, output_size = 2, 16, 8
    x = jax.random.normal(kx, (batch, input_size), jnp.float32)
    params = init_actor_params(kp, input_size, output_size)
    prepped = prepare_actor_params(params)  # one-time weight prep (hoisted out of hot path)

    out = jax.block_until_ready(actor_forward(x, prepped, output_size))
    ref = actor_reference(x, params)
    assert out.shape == (batch, output_size)
    # bf16 MXU operands bound accuracy to ~1e-2 relative (fine for an RL actor).
    assert jnp.allclose(out, ref, atol=2e-2, rtol=2e-2), "mismatch vs reference"
    assert jnp.allclose(jnp.sum(out, axis=-1), 1.0, atol=1e-3)

    # Second check: exercise multiple grid steps + batch padding path.
    batch2 = 40
    x2 = jax.random.normal(kx2, (batch2, input_size), jnp.float32)
    out2 = jax.block_until_ready(actor_forward(x2, prepped, output_size, tb=16))
    ref2 = actor_reference(x2, params)
    assert out2.shape == (batch2, output_size)
    assert jnp.allclose(out2, ref2, atol=2e-2, rtol=2e-2), "mismatch vs reference (tiled)"
    assert jnp.allclose(jnp.sum(out2, axis=-1), 1.0, atol=1e-3)

    print("KERNEL_OK")
</pallas_src>

<mosaic_0001>
module attributes {stable_mosaic.version = 11 : i64} {
  func.func @actor_kernel(%arg0: i32, %arg1: memref<8x16xf32, #tpu.memory_space<vmem>>, %arg2: memref<16x128xbf16, #tpu.memory_space<vmem>>, %arg3: memref<1x128xf32, #tpu.memory_space<vmem>>, %arg4: memref<128x128xbf16, #tpu.memory_space<vmem>>, %arg5: memref<1x128xf32, #tpu.memory_space<vmem>>, %arg6: memref<128x128xbf16, #tpu.memory_space<vmem>>, %arg7: memref<1x128xf32, #tpu.memory_space<vmem>>, %arg8: memref<8x8xf32, #tpu.memory_space<vmem>>) attributes {dimension_semantics = [#tpu.dimension_semantics<parallel>], iteration_bounds = array<i64: 1>, scalar_prefetch = 0 : i64, scratch_operands = 0 : i64, tpu.core_type = #tpu.core_type<tc>, window_params = [{transform_indices = @transform_0, window_bounds = array<i64: 8, 16>}, {pipeline_mode = #tpu.pipeline_mode<synchronous>, transform_indices = @transform_1, window_bounds = array<i64: 16, 128>}, {pipeline_mode = #tpu.pipeline_mode<synchronous>, transform_indices = @transform_2, window_bounds = array<i64: 1, 128>}, {pipeline_mode = #tpu.pipeline_mode<synchronous>, transform_indices = @transform_3, window_bounds = array<i64: 128, 128>}, {pipeline_mode = #tpu.pipeline_mode<synchronous>, transform_indices = @transform_4, window_bounds = array<i64: 1, 128>}, {pipeline_mode = #tpu.pipeline_mode<synchronous>, transform_indices = @transform_5, window_bounds = array<i64: 128, 128>}, {pipeline_mode = #tpu.pipeline_mode<synchronous>, transform_indices = @transform_6, window_bounds = array<i64: 1, 128>}, {transform_indices = @transform_7, window_bounds = array<i64: 8, 8>}]} {
    %c0 = arith.constant 0 : index
    %c0_0 = arith.constant 0 : index
    %0 = vector.load %arg1[%c0, %c0_0] : memref<8x16xf32, #tpu.memory_space<vmem>>, vector<8x16xf32>
    %1 = arith.truncf %0 : vector<8x16xf32> to vector<8x16xbf16>
    %c0_1 = arith.constant 0 : index
    %c0_2 = arith.constant 0 : index
    %2 = vector.load %arg2[%c0_1, %c0_2] : memref<16x128xbf16, #tpu.memory_space<vmem>>, vector<16x128xbf16>
    %cst = arith.constant dense<0.000000e+00> : vector<8x128xf32>
    %3 = tpu.matmul %1, %2, %cst {dimension_numbers = #tpu.dot_dimension_numbers<[1], [0], [0], [1], [0, 0, 1, 1], [], []>} : vector<8x16xbf16>, vector<16x128xbf16>, vector<8x128xf32> -> vector<8x128xf32>
    %c0_3 = arith.constant 0 : index
    %c0_4 = arith.constant 0 : index
    %4 = vector.load %arg3[%c0_3, %c0_4] : memref<1x128xf32, #tpu.memory_space<vmem>>, vector<1x128xf32>
    %5 = vector.broadcast %4 : vector<1x128xf32> to vector<8x128xf32>
    %6 = arith.addf %3, %5 : vector<8x128xf32>
    %cst_5 = arith.constant 0.000000e+00 : f32
    %7 = vector.broadcast %cst_5 : f32 to vector<8x128xf32>
    %8 = arith.maximumf %6, %7 : vector<8x128xf32>
    %9 = arith.truncf %8 : vector<8x128xf32> to vector<8x128xbf16>
    %c0_6 = arith.constant 0 : index
    %c0_7 = arith.constant 0 : index
    %10 = vector.load %arg4[%c0_6, %c0_7] : memref<128x128xbf16, #tpu.memory_space<vmem>>, vector<128x128xbf16>
    %cst_8 = arith.constant dense<0.000000e+00> : vector<8x128xf32>
    %11 = tpu.matmul %9, %10, %cst_8 {dimension_numbers = #tpu.dot_dimension_numbers<[1], [0], [0], [1], [0, 0, 1, 1], [], []>} : vector<8x128xbf16>, vector<128x128xbf16>, vector<8x128xf32> -> vector<8x128xf32>
    %c0_9 = arith.constant 0 : index
    %c0_10 = arith.constant 0 : index
    %12 = vector.load %arg5[%c0_9, %c0_10] : memref<1x128xf32, #tpu.memory_space<vmem>>, vector<1x128xf32>
    %13 = vector.broadcast %12 : vector<1x128xf32> to vector<8x128xf32>
    %14 = arith.addf %11, %13 : vector<8x128xf32>
    %cst_11 = arith.constant 0.000000e+00 : f32
    %15 = vector.broadcast %cst_11 : f32 to vector<8x128xf32>
    %16 = arith.maximumf %14, %15 : vector<8x128xf32>
    %17 = arith.truncf %16 : vector<8x128xf32> to vector<8x128xbf16>
    %c0_12 = arith.constant 0 : index
    %c0_13 = arith.constant 0 : index
    %18 = vector.load %arg6[%c0_12, %c0_13] : memref<128x128xbf16, #tpu.memory_space<vmem>>, vector<128x128xbf16>
    %cst_14 = arith.constant dense<0.000000e+00> : vector<8x128xf32>
    %19 = tpu.matmul %17, %18, %cst_14 {dimension_numbers = #tpu.dot_dimension_numbers<[1], [0], [0], [1], [0, 0, 1, 1], [], []>} : vector<8x128xbf16>, vector<128x128xbf16>, vector<8x128xf32> -> vector<8x128xf32>
    %c0_15 = arith.constant 0 : index
    %c0_16 = arith.constant 0 : index
    %20 = vector.load %arg7[%c0_15, %c0_16] : memref<1x128xf32, #tpu.memory_space<vmem>>, vector<1x128xf32>
    %21 = vector.broadcast %20 : vector<1x128xf32> to vector<8x128xf32>
    %22 = arith.addf %19, %21 : vector<8x128xf32>
    %cst_17 = arith.constant dense<0xFF800000> : vector<8xf32>
    %23 = vector.multi_reduction <maximumf>, %22, %cst_17 [1] : vector<8x128xf32> to vector<8xf32>
    %24 = vector.shape_cast %23 : vector<8xf32> to vector<8x1xf32>
    %25 = vector.broadcast %24 : vector<8x1xf32> to vector<8x128xf32>
    %26 = arith.subf %22, %25 : vector<8x128xf32>
    %27 = math.exp %26 : vector<8x128xf32>
    %cst_18 = arith.constant dense<0.000000e+00> : vector<8xf32>
    %28 = vector.multi_reduction <add>, %27, %cst_18 [1] : vector<8x128xf32> to vector<8xf32>
    %29 = vector.shape_cast %28 : vector<8xf32> to vector<8x1xf32>
    %30 = tpu.reciprocal %29 : vector<8x1xf32> -> vector<8x1xf32>
    %31 = vector.broadcast %30 : vector<8x1xf32> to vector<8x128xf32>
    %32 = arith.mulf %27, %31 : vector<8x128xf32>
    %33 = vector.extract_strided_slice %32 {offsets = [0, 0], sizes = [8, 8], strides = [1, 1]} : vector<8x128xf32> to vector<8x8xf32>
    %c0_19 = arith.constant 0 : index
    %c0_20 = arith.constant 0 : index
    %34 = vector.load %arg8[%c0_19, %c0_20] : memref<8x8xf32, #tpu.memory_space<vmem>>, vector<8x8xf32>
    tpu.vector_store %arg8[%c0_19, %c0_20], %33 {strides = array<i32>} : memref<8x8xf32, #tpu.memory_space<vmem>>, vector<8x8xf32>,
    return
  }
  func.func @transform_0(%arg0: i32) -> (i32, i32) {
    %c0_i32 = arith.constant 0 : i32
    %c0_i32_0 = arith.constant 0 : i32
    return %arg0, %c0_i32 : i32, i32
  }
  func.func @transform_1(%arg0: i32) -> (i32, i32) {
    %c0_i32 = arith.constant 0 : i32
    %c0_i32_0 = arith.constant 0 : i32
    %c0_i32_1 = arith.constant 0 : i32
    return %c0_i32, %c0_i32_0 : i32, i32
  }
  func.func @transform_2(%arg0: i32) -> (i32, i32) {
    %c0_i32 = arith.constant 0 : i32
    %c0_i32_0 = arith.constant 0 : i32
    %c0_i32_1 = arith.constant 0 : i32
    return %c0_i32, %c0_i32_0 : i32, i32
  }
  func.func @transform_3(%arg0: i32) -> (i32, i32) {
    %c0_i32 = arith.constant 0 : i32
    %c0_i32_0 = arith.constant 0 : i32
    %c0_i32_1 = arith.constant 0 : i32
    return %c0_i32, %c0_i32_0 : i32, i32
  }
  func.func @transform_4(%arg0: i32) -> (i32, i32) {
    %c0_i32 = arith.constant 0 : i32
    %c0_i32_0 = arith.constant 0 : i32
    %c0_i32_1 = arith.constant 0 : i32
    return %c0_i32, %c0_i32_0 : i32, i32
  }
  func.func @transform_5(%arg0: i32) -> (i32, i32) {
    %c0_i32 = arith.constant 0 : i32
    %c0_i32_0 = arith.constant 0 : i32
    %c0_i32_1 = arith.constant 0 : i32
    return %c0_i32, %c0_i32_0 : i32, i32
  }
  func.func @transform_6(%arg0: i32) -> (i32, i32) {
    %c0_i32 = arith.constant 0 : i32
    %c0_i32_0 = arith.constant 0 : i32
    %c0_i32_1 = arith.constant 0 : i32
    return %c0_i32, %c0_i32_0 : i32, i32
  }
  func.func @transform_7(%arg0: i32) -> (i32, i32) {
    %c0_i32 = arith.constant 0 : i32
    %c0_i32_0 = arith.constant 0 : i32
    return %arg0, %c0_i32 : i32, i32
  }
}

</mosaic_0001>

<llo_original>
// kernel: tpu_custom_call.1
$region0: #{tpu_custom_call.1}
  #allocation0 [shape = 'u32[]', space=smem, size = 0x4, offset = 0x4, fixed_abs, tag = 'smem constant byte address 0x4 - core index']
  #allocation1 [shape = 'u32[144,128]{1,0:T(1,128)}', space=vmem, size = 0x12000, scoped, tag = 'internal scratch']
  %s0 = inlined_call_operand.hbm [shape: f32[8,16], index: 0, kind: input, shape index: {}]
  %s1 = inlined_call_operand.hbm [shape: bf16[16,128], index: 1, kind: input, shape index: {}]
  %s2 = inlined_call_operand.vmem [shape: f32[1,128], index: 2, kind: input, shape index: {}]
  %s3 = inlined_call_operand.hbm [shape: bf16[128,128], index: 3, kind: input, shape index: {}]
  %s4 = inlined_call_operand.vmem [shape: f32[1,128], index: 4, kind: input, shape index: {}]
  %s5 = inlined_call_operand.hbm [shape: bf16[128,128], index: 5, kind: input, shape index: {}]
  %s6 = inlined_call_operand.vmem [shape: f32[1,128], index: 6, kind: input, shape index: {}]
  %s7 = inlined_call_operand.hbm [shape: f32[8,8], index: 7, kind: output, shape index: {}]
  %s8 = sld [smem:[#allocation0]]
  $region54: #{tpu_custom_call.1} parent=0
    _
  %s10 = ssub.s32 1, %s8
  %s11 = scalar_select 0, %s10, %s8
  $region1: #{tpu_custom_call.1} parent=0
    #allocation2 [shape = 'u8[4096]{0}', space=vmem, size = 0x1000, scoped, tag = 'input window, operand 0, single buffered']
    #allocation3 [shape = 's32[1]{0}', space=sflag, size = 0x4, scoped, tag = 'scoped memory for tpu_custom_call.1']
    #allocation4 [shape = 's32[1]{0}', space=sflag, size = 0x4, scoped, tag = 'scoped memory for tpu_custom_call.1']
    #allocation5 [shape = 'u8[4096]{0}', space=vmem, size = 0x1000, scoped, tag = 'input window, operand 1, single buffered']
    #allocation6 [shape = 's32[1]{0}', space=sflag, size = 0x4, scoped, tag = 'scoped memory for tpu_custom_call.1']
    #allocation7 [shape = 'u8[32768]{0}', space=vmem, size = 0x8000, scoped, tag = 'input window, operand 3, single buffered']
    #allocation8 [shape = 'u8[32768]{0}', space=vmem, size = 0x8000, scoped, tag = 'input window, operand 5, single buffered']
    #allocation9 [shape = 's32[1]{0}', space=sflag, size = 0x4, scoped, tag = 'scoped memory for tpu_custom_call.1']
    #allocation10 [shape = 'u8[4096]{0}', space=vmem, size = 0x1000, scoped, tag = 'output window, operand 0, single buffered']
    %12 = vsyncpa [#allocation3], 0
    %13 = vsyncpa [#allocation6], 0
    %14 = vsyncpa [#allocation9], 0
    %15 = vsyncpa [#allocation4], 0
    // Predicated region
    $region2: #{tpu_custom_call.1} parent=1 // pred_check
      _
    $region3: #{tpu_custom_call.1} parent=1 // pred_check_branch
      %17 = sbr.rel (0) target = $region5
    $region4: #{tpu_custom_call.1} parent=1 // pred_region
      %s19 = ssub.s32 128, 128
      %20 = vsyncadd [#allocation3], %s19
      %s22 = sshll.u32 [#allocation2], 4
      %s23 = int_to_ptr.vmem [resolvable:$true] %s22
      %25 = dma.hbm_to_vmem [thread:$0]  %s0, 128, %s23, [#allocation3]
    $region5: #{tpu_custom_call.1} parent=1 // pred_fallthru
      _
    // Predicated region
    $region6: #{tpu_custom_call.1} parent=1 // pred_check
      _
    $region7: #{tpu_custom_call.1} parent=1 // pred_check_branch
      %27 = sbr.rel (0) target = $region9
    $region8: #{tpu_custom_call.1} parent=1 // pred_region
      %s29 = ssub.s32 128, 128
      %30 = vsyncadd [#allocation6], %s29
      %s31 = sshll.u32 [#allocation5], 4
      %s32 = int_to_ptr.vmem [resolvable:$true] %s31
      %37 = dma.hbm_to_vmem [thread:$0]  %s1, 128, %s32, [#allocation6], 64, 64, 4
    $region9: #{tpu_custom_call.1} parent=1 // pred_fallthru
      _
    // Predicated region
    $region10: #{tpu_custom_call.1} parent=1 // pred_check
      _
    $region11: #{tpu_custom_call.1} parent=1 // pred_check_branch
      %39 = sbr.rel (0) target = $region13
    $region12: #{tpu_custom_call.1} parent=1 // pred_region
      _
    $region13: #{tpu_custom_call.1} parent=1 // pred_fallthru
      _
    // Predicated region
    $region14: #{tpu_custom_call.1} parent=1 // pred_check
      _
    $region15: #{tpu_custom_call.1} parent=1 // pred_check_branch
      %41 = sbr.rel (0) target = $region17
    $region16: #{tpu_custom_call.1} parent=1 // pred_region
      %s43 = ssub.s32 1024, 1024
      %44 = vsyncadd [#allocation6], %s43
      %s45 = sshll.u32 [#allocation7], 4
      %s46 = int_to_ptr.vmem [resolvable:$true] %s45
      %51 = dma.hbm_to_vmem [thread:$0]  %s3, 1024, %s46, [#allocation6], 64, 64, 4
    $region17: #{tpu_custom_call.1} parent=1 // pred_fallthru
      _
    // Predicated region
    $region18: #{tpu_custom_call.1} parent=1 // pred_check
      _
    $region19: #{tpu_custom_call.1} parent=1 // pred_check_branch
      %53 = sbr.rel (0) target = $region21
    $region20: #{tpu_custom_call.1} parent=1 // pred_region
      _
    $region21: #{tpu_custom_call.1} parent=1 // pred_fallthru
      _
    // Predicated region
    $region22: #{tpu_custom_call.1} parent=1 // pred_check
      _
    $region23: #{tpu_custom_call.1} parent=1 // pred_check_branch
      %55 = sbr.rel (0) target = $region25
    $region24: #{tpu_custom_call.1} parent=1 // pred_region
      %s57 = ssub.s32 1024, 1024
      %58 = vsyncadd [#allocation9], %s57
      %s59 = sshll.u32 [#allocation8], 4
      %s60 = int_to_ptr.vmem [resolvable:$true] %s59
      %65 = dma.hbm_to_vmem [thread:$0]  %s5, 1024, %s60, [#allocation9], 64, 64, 4
    $region25: #{tpu_custom_call.1} parent=1 // pred_fallthru
      _
    // Predicated region
    $region26: #{tpu_custom_call.1} parent=1 // pred_check
      _
    $region27: #{tpu_custom_call.1} parent=1 // pred_check_branch
      %67 = sbr.rel (0) target = $region29
    $region28: #{tpu_custom_call.1} parent=1 // pred_region
      _
    $region29: #{tpu_custom_call.1} parent=1 // pred_fallthru
      _
    // Predicated region
    $region30: #{tpu_custom_call.1} parent=1 // pred_check
      _
    $region31: #{tpu_custom_call.1} parent=1 // pred_check_branch
      %69 = sbr.rel (0) target = $region33
    $region32: #{tpu_custom_call.1} parent=1 // pred_region
      %70 = dma.done [#allocation3], 128
    $region33: #{tpu_custom_call.1} parent=1 // pred_fallthru
      _
    // Predicated region
    $region34: #{tpu_custom_call.1} parent=1 // pred_check
      _
    $region35: #{tpu_custom_call.1} parent=1 // pred_check_branch
      %72 = sbr.rel (0) target = $region37
    $region36: #{tpu_custom_call.1} parent=1 // pred_region
      %73 = dma.done [#allocation6], 128
    $region37: #{tpu_custom_call.1} parent=1 // pred_fallthru
      _
    // Predicated region
    $region38: #{tpu_custom_call.1} parent=1 // pred_check
      _
    $region39: #{tpu_custom_call.1} parent=1 // pred_check_branch
      %75 = sbr.rel (0) target = $region41
    $region40: #{tpu_custom_call.1} parent=1 // pred_region
      %76 = dma.done [#allocation6], 1024
    $region41: #{tpu_custom_call.1} parent=1 // pred_fallthru
      _
    // Predicated region
    $region42: #{tpu_custom_call.1} parent=1 // pred_check
      _
    $region43: #{tpu_custom_call.1} parent=1 // pred_check_branch
      %78 = sbr.rel (0) target = $region45
    $region44: #{tpu_custom_call.1} parent=1 // pred_region
      %79 = dma.done [#allocation9], 1024
    $region45: #{tpu_custom_call.1} parent=1 // pred_fallthru
      _
    %v81 = vld [vmem:[#allocation2] sm:$0xff]
    %v82 = vpack.c.bf16 %v81, %v81
    %v83 = vld [vmem:[#allocation5] sm:$0xf]
    %v84 = vld [vmem:[#allocation5 + $0x4] sm:$0xf]
    %v85 = vld [vmem:[%s2] sm:$0x1]
    %v87 = vlaneseq
    %v88 = vshrl.u32 %v87, 7
    %v89 = vsub.s32 0, %v88
    %v90 = vrot.slane %v85, %v89
    %v94 = vunpack.c.l.b16 %v83
    %v95 = vunpack.c.l.b16 %v84
    %v96 = vpack.c.b16 %v95, %v94
    %vm98 = vcmask 130048
    %v100 = vsel %vm98, %v82, 0
    %102 = vmatprep.subr.bf16.mxu0 0
    %103 = vmatpush1.bf16.msra.mxu0 %v96
    %104 = vmatprep.subr.bf16.mxu0 0
    %105 = vmatpush1.bf16.msra.mxu0 0
    %106 = vmatprep.subr.bf16.mxu0 0
    %107 = vmatpush1.bf16.msra.mxu0 0
    %108 = vmatprep.subr.bf16.mxu0 0
    %109 = vmatpush1.bf16.msra.mxu0 0
    %110 = vmatprep.subr.bf16.mxu0 0
    %111 = vmatpush1.bf16.msra.mxu0 0
    %112 = vmatprep.subr.bf16.mxu0 0
    %113 = vmatpush1.bf16.msra.mxu0 0
    %114 = vmatprep.subr.bf16.mxu0 0
    %115 = vmatpush1.bf16.msra.mxu0 0
    %116 = vmatprep.subr.bf16.mxu0 0
    %117 = vmatpush1.bf16.msra.mxu0 0
    %118 = vmatprep.subr.bf16.mxu0 0
    %119 = vmatpush1.bf16.msra.mxu0 0
    %120 = vmatprep.subr.bf16.mxu0 0
    %121 = vmatpush1.bf16.msra.mxu0 0
    %122 = vmatprep.subr.bf16.mxu0 0
    %123 = vmatpush1.bf16.msra.mxu0 0
    %124 = vmatprep.subr.bf16.mxu0 0
    %125 = vmatpush1.bf16.msra.mxu0 0
    %126 = vmatprep.subr.bf16.mxu0 0
    %127 = vmatpush1.bf16.msra.mxu0 0
    %128 = vmatprep.subr.bf16.mxu0 0
    %129 = vmatpush1.bf16.msra.mxu0 0
    %130 = vmatprep.subr.bf16.mxu0 0
    %131 = vmatpush1.bf16.msra.mxu0 0
    %132 = vmatprep.subr.bf16.mxu0 0
    %133 = vmatpush1.bf16.msra.mxu0 0
    %134 = vmatprep.mubr.bf16.mxu0 0
    %135 = vmatmul.mubr.bf16.gmra.mrb[0].mxu0 %v100
    %v136 = vpop.f32.mrb[0].mxu0
    %v137 = vadd.f32 %v90, %v136
    %v138 = vpop.f32.mrb[0].mxu0
    %v139 = vpop.f32.mrb[0].mxu0
    %v140 = vpop.f32.mrb[0].mxu0
    %141 = vdwg.mxu0
    %v142 = vmax.f32 %v137, 0.0
    %v143 = vpack.c.bf16 %v142, %v142
    %v144 = vld [vmem:[#allocation7] sm:$0xf]
    %v145 = vld [vmem:[#allocation7 + $0x4] sm:$0xf]
    %v146 = vld [vmem:[#allocation7 + $0x8] sm:$0xf]
    %v147 = vld [vmem:[#allocation7 + $0xc] sm:$0xf]
    %v148 = vld [vmem:[#allocation7 + $0x10] sm:$0xf]
    %v149 = vld [vmem:[#allocation7 + $0x14] sm:$0xf]
    %v150 = vld [vmem:[#allocation7 + $0x18] sm:$0xf]
    %v151 = vld [vmem:[#allocation7 + $0x1c] sm:$0xf]
    %v152 = vld [vmem:[#allocation7 + $0x20] sm:$0xf]
    %v153 = vld [vmem:[#allocation7 + $0x24] sm:$0xf]
    %v154 = vld [vmem:[#allocation7 + $0x28] sm:$0xf]
    %v155 = vld [vmem:[#allocation7 + $0x2c] sm:$0xf]
    %v156 = vld [vmem:[#allocation7 + $0x30] sm:$0xf]
    %v157 = vld [vmem:[#allocation7 + $0x34] sm:$0xf]
    %v158 = vld [vmem:[#allocation7 + $0x38] sm:$0xf]
    %v159 = vld [vmem:[#allocation7 + $0x3c] sm:$0xf]
    %v160 = vld [vmem:[%s4] sm:$0x1]
    %v162 = vlaneseq
    %v163 = vshrl.u32 %v162, 7
    %v164 = vsub.s32 0, %v163
    %v165 = vrot.slane %v160, %v164
    %v183 = vunpack.c.l.b16 %v144
    %v184 = vunpack.c.l.b16 %v145
    %v185 = vunpack.c.l.b16 %v146
    %v186 = vunpack.c.l.b16 %v147
    %v187 = vunpack.c.l.b16 %v148
    %v188 = vunpack.c.l.b16 %v149
    %v189 = vunpack.c.l.b16 %v150
    %v190 = vunpack.c.l.b16 %v151
    %v191 = vunpack.c.l.b16 %v152
    %v192 = vunpack.c.l.b16 %v153
    %v193 = vunpack.c.l.b16 %v154
    %v194 = vunpack.c.l.b16 %v155
    %v195 = vunpack.c.l.b16 %v156
    %v196 = vunpack.c.l.b16 %v157
    %v197 = vunpack.c.l.b16 %v158
    %v198 = vunpack.c.l.b16 %v159
    %v199 = vpack.c.b16 %v184, %v183
    %v200 = vpack.c.b16 %v186, %v185
    %v201 = vpack.c.b16 %v188, %v187
    %v202 = vpack.c.b16 %v190, %v189
    %v203 = vpack.c.b16 %v192, %v191
    %v204 = vpack.c.b16 %v194, %v193
    %v205 = vpack.c.b16 %v196, %v195
    %v206 = vpack.c.b16 %v198, %v197
    %215 = vmatprep.subr.bf16.mxu0 0
    %216 = vmatpush1.bf16.msra.mxu0 %v199
    %217 = vmatprep.subr.bf16.mxu0 0
    %218 = vmatpush1.bf16.msra.mxu0 %v200
    %219 = vmatprep.subr.bf16.mxu0 0
    %220 = vmatpush1.bf16.msra.mxu0 %v201
    %221 = vmatprep.subr.bf16.mxu0 0
    %222 = vmatpush1.bf16.msra.mxu0 %v202
    %223 = vmatprep.subr.bf16.mxu0 0
    %224 = vmatpush1.bf16.msra.mxu0 %v203
    %225 = vmatprep.subr.bf16.mxu0 0
    %226 = vmatpush1.bf16.msra.mxu0 %v204
    %227 = vmatprep.subr.bf16.mxu0 0
    %228 = vmatpush1.bf16.msra.mxu0 %v205
    %229 = vmatprep.subr.bf16.mxu0 0
    %230 = vmatpush1.bf16.msra.mxu0 %v206
    %231 = vmatprep.subr.bf16.mxu0 0
    %232 = vmatpush1.bf16.msra.mxu0 0
    %233 = vmatprep.subr.bf16.mxu0 0
    %234 = vmatpush1.bf16.msra.mxu0 0
    %235 = vmatprep.subr.bf16.mxu0 0
    %236 = vmatpush1.bf16.msra.mxu0 0
    %237 = vmatprep.subr.bf16.mxu0 0
    %238 = vmatpush1.bf16.msra.mxu0 0
    %239 = vmatprep.subr.bf16.mxu0 0
    %240 = vmatpush1.bf16.msra.mxu0 0
    %241 = vmatprep.subr.bf16.mxu0 0
    %242 = vmatpush1.bf16.msra.mxu0 0
    %243 = vmatprep.subr.bf16.mxu0 0
    %244 = vmatpush1.bf16.msra.mxu0 0
    %245 = vmatprep.subr.bf16.mxu0 0
    %246 = vmatpush1.bf16.msra.mxu0 0
    %247 = vmatprep.mubr.bf16.mxu0 0
    %248 = vmatmul.mubr.bf16.gmra.mrb[0].mxu0 %v143
    %v249 = vpop.f32.mrb[0].mxu0
    %v250 = vadd.f32 %v165, %v249
    %v251 = vpop.f32.mrb[0].mxu0
    %v252 = vpop.f32.mrb[0].mxu0
    %v253 = vpop.f32.mrb[0].mxu0
    %254 = vdwg.mxu0
    %v255 = vmax.f32 %v250, 0.0
    %v256 = vpack.c.bf16 %v255, %v255
    %v257 = vld [vmem:[#allocation8] sm:$0xf]
    %v258 = vld [vmem:[#allocation8 + $0x4] sm:$0xf]
    %v259 = vld [vmem:[#allocation8 + $0x8] sm:$0xf]
    %v260 = vld [vmem:[#allocation8 + $0xc] sm:$0xf]
    %v261 = vld [vmem:[#allocation8 + $0x10] sm:$0xf]
    %v262 = vld [vmem:[#allocation8 + $0x14] sm:$0xf]
    %v263 = vld [vmem:[#allocation8 + $0x18] sm:$0xf]
    %v264 = vld [vmem:[#allocation8 + $0x1c] sm:$0xf]
    %v265 = vld [vmem:[#allocation8 + $0x20] sm:$0xf]
    %v266 = vld [vmem:[#allocation8 + $0x24] sm:$0xf]
    %v267 = vld [vmem:[#allocation8 + $0x28] sm:$0xf]
    %v268 = vld [vmem:[#allocation8 + $0x2c] sm:$0xf]
    %v269 = vld [vmem:[#allocation8 + $0x30] sm:$0xf]
    %v270 = vld [vmem:[#allocation8 + $0x34] sm:$0xf]
    %v271 = vld [vmem:[#allocation8 + $0x38] sm:$0xf]
    %v272 = vld [vmem:[#allocation8 + $0x3c] sm:$0xf]
    %v273 = vld [vmem:[%s6] sm:$0x1]
    %v275 = vlaneseq
    %v276 = vshrl.u32 %v275, 7
    %v277 = vsub.s32 0, %v276
    %v278 = vrot.slane %v273, %v277
    %v296 = vunpack.c.l.b16 %v257
    %v297 = vunpack.c.l.b16 %v258
    %v298 = vunpack.c.l.b16 %v259
    %v299 = vunpack.c.l.b16 %v260
    %v300 = vunpack.c.l.b16 %v261
    %v301 = vunpack.c.l.b16 %v262
    %v302 = vunpack.c.l.b16 %v263
    %v303 = vunpack.c.l.b16 %v264
    %v304 = vunpack.c.l.b16 %v265
    %v305 = vunpack.c.l.b16 %v266
    %v306 = vunpack.c.l.b16 %v267
    %v307 = vunpack.c.l.b16 %v268
    %v308 = vunpack.c.l.b16 %v269
    %v309 = vunpack.c.l.b16 %v270
    %v310 = vunpack.c.l.b16 %v271
    %v311 = vunpack.c.l.b16 %v272
    %v312 = vpack.c.b16 %v297, %v296
    %v313 = vpack.c.b16 %v299, %v298
    %v314 = vpack.c.b16 %v301, %v300
    %v315 = vpack.c.b16 %v303, %v302
    %v316 = vpack.c.b16 %v305, %v304
    %v317 = vpack.c.b16 %v307, %v306
    %v318 = vpack.c.b16 %v309, %v308
    %v319 = vpack.c.b16 %v311, %v310
    %328 = vmatprep.subr.bf16.mxu0 0
    %329 = vmatpush1.bf16.msra.mxu0 %v312
    %330 = vmatprep.subr.bf16.mxu0 0
    %331 = vmatpush1.bf16.msra.mxu0 %v313
    %332 = vmatprep.subr.bf16.mxu0 0
    %333 = vmatpush1.bf16.msra.mxu0 %v314
    %334 = vmatprep.subr.bf16.mxu0 0
    %335 = vmatpush1.bf16.msra.mxu0 %v315
    %336 = vmatprep.subr.bf16.mxu0 0
    %337 = vmatpush1.bf16.msra.mxu0 %v316
    %338 = vmatprep.subr.bf16.mxu0 0
    %339 = vmatpush1.bf16.msra.mxu0 %v317
    %340 = vmatprep.subr.bf16.mxu0 0
    %341 = vmatpush1.bf16.msra.mxu0 %v318
    %342 = vmatprep.subr.bf16.mxu0 0
    %343 = vmatpush1.bf16.msra.mxu0 %v319
    %344 = vmatprep.subr.bf16.mxu0 0
    %345 = vmatpush1.bf16.msra.mxu0 0
    %346 = vmatprep.subr.bf16.mxu0 0
    %347 = vmatpush1.bf16.msra.mxu0 0
    %348 = vmatprep.subr.bf16.mxu0 0
    %349 = vmatpush1.bf16.msra.mxu0 0
    %350 = vmatprep.subr.bf16.mxu0 0
    %351 = vmatpush1.bf16.msra.mxu0 0
    %352 = vmatprep.subr.bf16.mxu0 0
    %353 = vmatpush1.bf16.msra.mxu0 0
    %354 = vmatprep.subr.bf16.mxu0 0
    %355 = vmatpush1.bf16.msra.mxu0 0
    %356 = vmatprep.subr.bf16.mxu0 0
    %357 = vmatpush1.bf16.msra.mxu0 0
    %358 = vmatprep.subr.bf16.mxu0 0
    %359 = vmatpush1.bf16.msra.mxu0 0
    %360 = vmatprep.mubr.bf16.mxu0 0
    %361 = vmatmul.mubr.bf16.gmra.mrb[0].mxu0 %v256
    %v362 = vpop.f32.mrb[0].mxu0
    %v363 = vadd.f32 %v278, %v362
    %v364 = vpop.f32.mrb[0].mxu0
    %v365 = vpop.f32.mrb[0].mxu0
    %v366 = vpop.f32.mrb[0].mxu0
    %367 = vdwg.mxu0
    %368 = vmax.xlane.f32.xlu0 %v363
    %v369 = vpop.xlane.xlu0 %368
    %v370 = vsub.f32 %v363, %v369
    %v371 = vmul.f32 %v370, 1.442695
    %v372 = vpow.pop %v371
    %373 = vadd.xlane.f32.xlu0 %v372
    %v374 = vpop.xlane.xlu0 %373
    %v375 = vrcp.pop %v374
    %v376 = vmul.f32 %v372, %v375
    %vm377 = vcmask 64512
    %378 = vst.msk [vmem:[#allocation10] sm:$0xff] %vm377, %v376
    // Predicated region
    $region46: #{tpu_custom_call.1} parent=1 // pred_check
      _
    $region47: #{tpu_custom_call.1} parent=1 // pred_check_branch
      %380 = sbr.rel (0) target = $region49
    $region48: #{tpu_custom_call.1} parent=1 // pred_region
      %s382 = ssub.s32 128, 128
      %383 = vsyncadd [#allocation4], %s382
      %s385 = sshll.u32 [#allocation10], 4
      %s386 = int_to_ptr.vmem [resolvable:$true] %s385
      %388 = dma.vmem_to_hbm [thread:$0]  %s386, 128, %s7, [#allocation4]
    $region49: #{tpu_custom_call.1} parent=1 // pred_fallthru
      _
    // Predicated region
    $region50: #{tpu_custom_call.1} parent=1 // pred_check
      _
    $region51: #{tpu_custom_call.1} parent=1 // pred_check_branch
      %390 = sbr.rel (0) target = $region53
    $region52: #{tpu_custom_call.1} parent=1 // pred_region
      %391 = dma.done [#allocation4], 128
    $region53: #{tpu_custom_call.1} parent=1 // pred_fallthru
      _
    %392 = vsyncpa [#allocation3], 1
    %393 = vsyncpa [#allocation6], 1
    %394 = vsyncpa [#allocation9], 1
    %395 = vsyncpa [#allocation4], 1

</llo_original>
